<compile_context>
chip_gen: v7x
topology: tpu7x:2x2x1
jax: 0.10.0
libtpu: 0.0.40
codegen_flags: <defaults>
</compile_context>

<pallas_src>
import functools

import jax
import jax.numpy as jnp
from jax.experimental import pallas as pl
from jax.experimental.pallas import tpu as pltpu


AUX_WEIGHT = 0.4


def _round_up(x, m):
    return (x + m - 1) // m * m


def _vmem_per_pixel_bytes(c, itemsize):
    # pred+aux double-buffered inputs, int32 target double-buffered, f32 acc lane,
    # ~5 f32 (C,) compiler temporaries (x, masked, exp, ...).
    return 2 * 2 * c * itemsize + 2 * 2 * 4 + 4 + 5 * c * 4


def _choose_tile(c, hw, itemsize, target_tile_bytes, vmem_budget_bytes):
    """Pixel tile: big enough that pred+aux move ~target_tile_bytes per grid step,
    clamped to the image size and the VMEM budget."""
    tile = _round_up(max(128, target_tile_bytes // (2 * c * itemsize)), 128)
    tile_cap = max(128, (vmem_budget_bytes // _vmem_per_pixel_bytes(c, itemsize)) // 128 * 128)
    tile = min(tile, tile_cap, _round_up(hw, 128))
    return max(tile, 128)


def _ce_per_pixel(logits, onehot, use_mxu_reduce):
    """Per-pixel CE for a (C, T) block: classes on sublanes, pixels on lanes."""
    x = logits.astype(jnp.float32)
    m = jnp.max(x, axis=0, keepdims=True)                     # (1, T)
    masked = jnp.where(onehot, x, 0.0)                        # (C, T)
    e = jnp.exp(x - m)                                        # (C, T)
    if use_mxu_reduce:
        # Offload the sublane reductions to the idle MXU (v7x: VPU is the binding slot).
        ones = jnp.ones((1, x.shape[0]), jnp.float32)
        tgt_logit = jnp.dot(ones, masked, preferred_element_type=jnp.float32)
        sumexp = jnp.dot(ones, e, preferred_element_type=jnp.float32)
    else:
        tgt_logit = jnp.sum(masked, axis=0, keepdims=True)    # (1, T)
        sumexp = jnp.sum(e, axis=0, keepdims=True)            # (1, T)
    return m + jnp.log(sumexp) - tgt_logit                    # (1, T)


def _psp_loss_kernel(pred_ref, aux_ref, tgt_ref, out_ref, acc_ref, *,
                     aux_weight, hw, inv_total, tiles_per_split, need_mask,
                     use_mxu_reduce):
    s_idx = pl.program_id(1)
    t_idx = pl.program_id(2)
    c, tile_w = pred_ref.shape

    # Per (image, split) accumulator reset at the first pixel tile.
    @pl.when(t_idx == 0)
    def _():
        acc_ref[...] = jnp.zeros_like(acc_ref)

    tgt = tgt_ref[...]                                              # (1, T) int32
    class_ids = jax.lax.broadcasted_iota(jnp.int32, (c, 1), 0)      # tiny iota
    onehot = class_ids == tgt                                       # (C, T) via broadcast

    # Mask for partial tail tiles / clamped overhang tiles (statically elided when
    # everything divides).
    if need_mask:
        lane_ids = jax.lax.broadcasted_iota(jnp.int32, (1, tile_w), 1)
        start = (s_idx * tiles_per_split + t_idx) * tile_w
        valid = (start + lane_ids) < hw                             # (1, T)
    else:
        valid = None

    per_pix = _ce_per_pixel(pred_ref[...], onehot, use_mxu_reduce)
    per_pix = per_pix + aux_weight * _ce_per_pixel(aux_ref[...], onehot, use_mxu_reduce)
    if valid is not None:
        per_pix = jnp.where(valid, per_pix, 0.0)

    # Lane-wise partial sums; no cross-lane reduce / scalar RMW on the hot path.
    acc_ref[...] += per_pix

    # Finalize: one cross-lane reduce, 1/(N*H*W) scale fused in.
    @pl.when(t_idx == pl.num_programs(2) - 1)
    def _():
        total = jnp.sum(acc_ref[...]) * inv_total
        lane = jax.lax.broadcasted_iota(jnp.int32, out_ref.shape, out_ref.ndim - 1)
        out_ref[...] = jnp.where(lane == 0, total, 0.0).astype(out_ref.dtype)


def psp_loss(pred, aux, target, aux_weight=AUX_WEIGHT, *,
             target_tile_bytes=4 << 20, vmem_budget_bytes=None,
             use_mxu_reduce=False):
    """pred, aux: (N, C, H, W) float logits (f32 or bf16 -- pass bf16 end-to-end on
    mem-bound v5e/v6e for ~2x less HBM read traffic); target: (N, H, W) int."""
    n, c, h, w = pred.shape
    hw = h * w
    total_pixels = n * hw
    itemsize = jnp.dtype(pred.dtype).itemsize

    # Free reshapes only -- no transpose, logits stay in native NCHW order.
    pred3d = pred.reshape(n, c, hw)
    aux3d = aux.reshape(n, c, hw)
    tgt3d = target.reshape(n, 1, hw).astype(jnp.int32)

    # Generation-aware VMEM budget (v7x: 64 MiB/TC, v5e/v6e: 128 MiB).
    try:
        vmem_cap = int(pltpu.get_tpu_info().vmem_capacity_bytes)
    except Exception:
        vmem_cap = 64 << 20  # conservative: safe on every generation
    if vmem_budget_bytes is None:
        vmem_budget_bytes = (vmem_cap * 5) // 8

    tile = _choose_tile(c, hw, itemsize, int(target_tile_bytes), int(vmem_budget_bytes))
    total_tiles = pl.cdiv(hw, tile)

    # Megacore: when the batch alone can't keep two TensorCores busy (N == 1 is the
    # common segmentation-eval case), split the pixel range into a second parallel
    # axis.  Excess iterations of the last split clamp to the final block and are
    # fully masked in-kernel.
    n_splits = 2 if (n == 1 and total_tiles >= 2) else 1
    tiles_per_split = pl.cdiv(total_tiles, n_splits)
    last_block = total_tiles - 1
    need_mask = (hw % tile != 0) or (n_splits * tiles_per_split > total_tiles)

    if n_splits == 1:
        logits_map = lambda i, s, t: (i, 0, t)
        tgt_map = lambda i, s, t: (i, 0, t)
    else:
        logits_map = lambda i, s, t: (i, 0, jnp.minimum(s * tiles_per_split + t, last_block))
        tgt_map = lambda i, s, t: (i, 0, jnp.minimum(s * tiles_per_split + t, last_block))
    out_map = lambda i, s, t: (i * n_splits + s, 0, 0)

    grid = (n, n_splits, tiles_per_split)

    est_vmem = _vmem_per_pixel_bytes(c, itemsize) * tile
    vmem_limit = int(max(min(est_vmem + (8 << 20), (vmem_cap * 3) // 4), 16 << 20))

    kernel = functools.partial(
        _psp_loss_kernel,
        aux_weight=float(aux_weight),
        hw=hw,
        inv_total=1.0 / float(total_pixels),
        tiles_per_split=tiles_per_split,
        need_mask=need_mask,
        use_mxu_reduce=bool(use_mxu_reduce),
    )

    out = pl.pallas_call(
        kernel,
        out_shape=jax.ShapeDtypeStruct((n * n_splits, 1, 128), jnp.float32),
        grid_spec=pltpu.PrefetchScalarGridSpec(
            num_scalar_prefetch=0,
            grid=grid,
            in_specs=[
                pl.BlockSpec((None, c, tile), logits_map),
                pl.BlockSpec((None, c, tile), logits_map),
                pl.BlockSpec((None, 1, tile), tgt_map),
            ],
            out_specs=pl.BlockSpec((None, 1, 128), out_map),
            scratch_shapes=[pltpu.VMEM((1, tile), jnp.float32)],
        ),
        compiler_params=pltpu.CompilerParams(
            dimension_semantics=("parallel", "parallel", "arbitrary"),
            vmem_limit_bytes=vmem_limit,
        ),
    )(pred3d, aux3d, tgt3d)

    # Tiny finalize: per-(image, split) partials (already 1/P scaled, aux fused,
    # zeros in unused lanes) -> scalar loss.
    return jnp.sum(out)


def _psp_loss_ref(pred, aux, target, aux_weight=AUX_WEIGHT):
    """Pure-JAX reference for correctness checking."""
    def ce(logits_nchw, tgt):
        n, c, h, w = logits_nchw.shape
        logits = jnp.transpose(logits_nchw, (0, 2, 3, 1)).reshape(-1, c).astype(jnp.float32)
        tgt = tgt.reshape(-1)
        lse = jax.scipy.special.logsumexp(logits, axis=-1)
        tgt_logit = jnp.take_along_axis(logits, tgt[:, None], axis=-1)[:, 0]
        return jnp.mean(lse - tgt_logit)

    return ce(pred, target) + aux_weight * ce(aux, target)


if __name__ == "__main__":
    key = jax.random.PRNGKey(0)

    cases = [
        # (n, c, h, w, extra kwargs)
        dict(n=2, c=8, h=16, w=16),                                    # main case
        dict(n=2, c=8, h=20, w=20),                                    # masked partial tail
        dict(n=1, c=5, h=24, w=24, target_tile_bytes=5 * 128 * 2 * 4), # pixel-split + overhang
    ]

    main_loss = None
    for idx, cfg in enumerate(cases):
        k = jax.random.fold_in(key, idx)
        k1, k2, k3 = jax.random.split(k, 3)
        n, c, h, w = cfg["n"], cfg["c"], cfg["h"], cfg["w"]
        pred = jax.random.normal(k1, (n, c, h, w), dtype=jnp.float32)
        aux = jax.random.normal(k2, (n, c, h, w), dtype=jnp.float32)
        target = jax.random.randint(k3, (n, h, w), 0, c, dtype=jnp.int32)

        kw = {kk: v for kk, v in cfg.items() if kk == "target_tile_bytes"}
        loss = jax.block_until_ready(psp_loss(pred, aux, target, **kw))
        ref = _psp_loss_ref(pred, aux, target)
        assert jnp.allclose(loss, ref, rtol=1e-5, atol=1e-5), (cfg, loss, ref)
        if idx == 0:
            main_loss = loss

    assert main_loss is not None
    print("KERNEL_OK")
</pallas_src>

<mosaic_0001>
module attributes {stable_mosaic.version = 11 : i64} {
  func.func @_psp_loss_kernel(%arg0: i32, %arg1: i32, %arg2: i32, %arg3: memref<1x8x256xf32, #tpu.memory_space<vmem>>, %arg4: memref<1x8x256xf32, #tpu.memory_space<vmem>>, %arg5: memref<1x1x256xi32, #tpu.memory_space<vmem>>, %arg6: memref<1x1x128xf32, #tpu.memory_space<vmem>>, %arg7: memref<1x256xf32, #tpu.memory_space<vmem>>) attributes {dimension_semantics = [#tpu.dimension_semantics<parallel>, #tpu.dimension_semantics<parallel>, #tpu.dimension_semantics<arbitrary>], iteration_bounds = array<i64: 2, 1, 1>, scalar_prefetch = 0 : i64, scratch_operands = 1 : i64, tpu.core_type = #tpu.core_type<tc>, window_params = [{transform_indices = @transform_0, window_bounds = array<i64: 1, 8, 256>}, {transform_indices = @transform_1, window_bounds = array<i64: 1, 8, 256>}, {transform_indices = @transform_2, window_bounds = array<i64: 1, 1, 256>}, {transform_indices = @transform_3, window_bounds = array<i64: 1, 1, 128>}]} {
    %c0_i32 = arith.constant 0 : i32
    %0 = arith.cmpi eq, %arg2, %c0_i32 : i32
    %1 = arith.extui %0 : i1 to i32
    %c0_i32_0 = arith.constant 0 : i32
    %2 = arith.cmpi ne, %1, %c0_i32_0 : i32
    scf.if %2 {
      %cst_23 = arith.constant 0.000000e+00 : f32
      %50 = vector.broadcast %cst_23 : f32 to vector<1x256xf32>
      %c0_24 = arith.constant 0 : index
      %c0_25 = arith.constant 0 : index
      %51 = vector.load %arg7[%c0_24, %c0_25] : memref<1x256xf32, #tpu.memory_space<vmem>>, vector<1x256xf32>
      tpu.vector_store %arg7[%c0_24, %c0_25], %50 {strides = array<i32>} : memref<1x256xf32, #tpu.memory_space<vmem>>, vector<1x256xf32>,
    } else {
    }
    %c0 = arith.constant 0 : index
    %c0_1 = arith.constant 0 : index
    %c0_2 = arith.constant 0 : index
    %3 = vector.load %arg5[%c0, %c0_1, %c0_2] : memref<1x1x256xi32, #tpu.memory_space<vmem>>, vector<1x1x256xi32>
    %4 = vector.shape_cast %3 : vector<1x1x256xi32> to vector<1x256xi32>
    %5 = tpu.iota {dimensions = array<i32: 0>} : vector<8x1xi32>
    %6 = vector.broadcast %5 : vector<8x1xi32> to vector<8x256xi32>
    %7 = vector.broadcast %4 : vector<1x256xi32> to vector<8x256xi32>
    %8 = arith.cmpi eq, %6, %7 : vector<8x256xi32>
    %c0_3 = arith.constant 0 : index
    %c0_4 = arith.constant 0 : index
    %c0_5 = arith.constant 0 : index
    %9 = vector.load %arg3[%c0_3, %c0_4, %c0_5] : memref<1x8x256xf32, #tpu.memory_space<vmem>>, vector<1x8x256xf32>
    %10 = vector.shape_cast %9 : vector<1x8x256xf32> to vector<8x256xf32>
    %cst = arith.constant dense<0xFF800000> : vector<256xf32>
    %11 = vector.multi_reduction <maximumf>, %10, %cst [0] : vector<8x256xf32> to vector<256xf32>
    %12 = vector.shape_cast %11 : vector<256xf32> to vector<1x256xf32>
    %cst_6 = arith.constant 0.000000e+00 : f32
    %13 = vector.broadcast %cst_6 : f32 to vector<8x256xf32>
    %14 = arith.select %8, %10, %13 : vector<8x256xi1>, vector<8x256xf32>
    %15 = vector.broadcast %12 : vector<1x256xf32> to vector<8x256xf32>
    %16 = arith.subf %10, %15 : vector<8x256xf32>
    %17 = math.exp %16 : vector<8x256xf32>
    %cst_7 = arith.constant dense<0.000000e+00> : vector<256xf32>
    %18 = vector.multi_reduction <add>, %14, %cst_7 [0] : vector<8x256xf32> to vector<256xf32>
    %19 = vector.shape_cast %18 : vector<256xf32> to vector<1x256xf32>
    %cst_8 = arith.constant dense<0.000000e+00> : vector<256xf32>
    %20 = vector.multi_reduction <add>, %17, %cst_8 [0] : vector<8x256xf32> to vector<256xf32>
    %21 = vector.shape_cast %20 : vector<256xf32> to vector<1x256xf32>
    %22 = math.log %21 : vector<1x256xf32>
    %23 = arith.addf %12, %22 : vector<1x256xf32>
    %24 = arith.subf %23, %19 : vector<1x256xf32>
    %c0_9 = arith.constant 0 : index
    %c0_10 = arith.constant 0 : index
    %c0_11 = arith.constant 0 : index
    %25 = vector.load %arg4[%c0_9, %c0_10, %c0_11] : memref<1x8x256xf32, #tpu.memory_space<vmem>>, vector<1x8x256xf32>
    %26 = vector.shape_cast %25 : vector<1x8x256xf32> to vector<8x256xf32>
    %cst_12 = arith.constant dense<0xFF800000> : vector<256xf32>
    %27 = vector.multi_reduction <maximumf>, %26, %cst_12 [0] : vector<8x256xf32> to vector<256xf32>
    %28 = vector.shape_cast %27 : vector<256xf32> to vector<1x256xf32>
    %cst_13 = arith.constant 0.000000e+00 : f32
    %29 = vector.broadcast %cst_13 : f32 to vector<8x256xf32>
    %30 = arith.select %8, %26, %29 : vector<8x256xi1>, vector<8x256xf32>
    %31 = vector.broadcast %28 : vector<1x256xf32> to vector<8x256xf32>
    %32 = arith.subf %26, %31 : vector<8x256xf32>
    %33 = math.exp %32 : vector<8x256xf32>
    %cst_14 = arith.constant dense<0.000000e+00> : vector<256xf32>
    %34 = vector.multi_reduction <add>, %30, %cst_14 [0] : vector<8x256xf32> to vector<256xf32>
    %35 = vector.shape_cast %34 : vector<256xf32> to vector<1x256xf32>
    %cst_15 = arith.constant dense<0.000000e+00> : vector<256xf32>
    %36 = vector.multi_reduction <add>, %33, %cst_15 [0] : vector<8x256xf32> to vector<256xf32>
    %37 = vector.shape_cast %36 : vector<256xf32> to vector<1x256xf32>
    %38 = math.log %37 : vector<1x256xf32>
    %39 = arith.addf %28, %38 : vector<1x256xf32>
    %40 = arith.subf %39, %35 : vector<1x256xf32>
    %cst_16 = arith.constant 4.000000e-01 : f32
    %41 = vector.broadcast %cst_16 : f32 to vector<1x256xf32>
    %42 = arith.mulf %41, %40 : vector<1x256xf32>
    %43 = arith.addf %24, %42 : vector<1x256xf32>
    %c0_17 = arith.constant 0 : index
    %c0_18 = arith.constant 0 : index
    %44 = vector.load %arg7[%c0_17, %c0_18] : memref<1x256xf32, #tpu.memory_space<vmem>>, vector<1x256xf32>
    %45 = arith.addf %44, %43 : vector<1x256xf32>
    %c0_19 = arith.constant 0 : index
    %c0_20 = arith.constant 0 : index
    %46 = vector.load %arg7[%c0_19, %c0_20] : memref<1x256xf32, #tpu.memory_space<vmem>>, vector<1x256xf32>
    tpu.vector_store %arg7[%c0_19, %c0_20], %45 {strides = array<i32>} : memref<1x256xf32, #tpu.memory_space<vmem>>, vector<1x256xf32>,
    %c0_i32_21 = arith.constant 0 : i32
    %47 = arith.cmpi eq, %arg2, %c0_i32_21 : i32
    %48 = arith.extui %47 : i1 to i32
    %c0_i32_22 = arith.constant 0 : i32
    %49 = arith.cmpi ne, %48, %c0_i32_22 : i32
    scf.if %49 {
      %c0_23 = arith.constant 0 : index
      %c0_24 = arith.constant 0 : index
      %50 = vector.load %arg7[%c0_23, %c0_24] : memref<1x256xf32, #tpu.memory_space<vmem>>, vector<1x256xf32>
      %51 = vector.shape_cast %50 : vector<1x256xf32> to vector<1x1x256xf32>
      %cst_25 = arith.constant dense<0.000000e+00> : vector<1xf32>
      %52 = vector.multi_reduction <add>, %51, %cst_25 [1, 2] : vector<1x1x256xf32> to vector<1xf32>
      %53 = vector.shape_cast %52 : vector<1xf32> to vector<1x1x1xf32>
      %54 = vector.extract %53[0, 0, 0] : f32 from vector<1x1x1xf32>
      %cst_26 = arith.constant 0.001953125 : f32
      %55 = arith.mulf %54, %cst_26 : f32
      %56 = tpu.iota {dimensions = array<i32: 1>} : vector<1x128xi32>
      %c0_i32_27 = arith.constant 0 : i32
      %57 = vector.broadcast %c0_i32_27 : i32 to vector<1x128xi32>
      %58 = arith.cmpi eq, %56, %57 : vector<1x128xi32>
      %cst_28 = arith.constant 0.000000e+00 : f32
      %59 = vector.broadcast %55 : f32 to vector<1x128xf32>
      %60 = vector.broadcast %cst_28 : f32 to vector<1x128xf32>
      %61 = arith.select %58, %59, %60 : vector<1x128xi1>, vector<1x128xf32>
      %c0_29 = arith.constant 0 : index
      %c0_30 = arith.constant 0 : index
      %c0_31 = arith.constant 0 : index
      %62 = vector.load %arg6[%c0_29, %c0_30, %c0_31] : memref<1x1x128xf32, #tpu.memory_space<vmem>>, vector<1x1x128xf32>
      %63 = vector.shape_cast %62 : vector<1x1x128xf32> to vector<1x128xf32>
      %64 = vector.shape_cast %61 : vector<1x128xf32> to vector<1x1x128xf32>
      tpu.vector_store %arg6[%c0_29, %c0_30, %c0_31], %64 {strides = array<i32>} : memref<1x1x128xf32, #tpu.memory_space<vmem>>, vector<1x1x128xf32>,
    } else {
    }
    return
  }
  func.func @transform_0(%arg0: i32, %arg1: i32, %arg2: i32) -> (i32, i32, i32) {
    %c0_i32 = arith.constant 0 : i32
    %c0_i32_0 = arith.constant 0 : i32
    return %arg0, %c0_i32, %arg2 : i32, i32, i32
  }
  func.func @transform_1(%arg0: i32, %arg1: i32, %arg2: i32) -> (i32, i32, i32) {
    %c0_i32 = arith.constant 0 : i32
    %c0_i32_0 = arith.constant 0 : i32
    return %arg0, %c0_i32, %arg2 : i32, i32, i32
  }
  func.func @transform_2(%arg0: i32, %arg1: i32, %arg2: i32) -> (i32, i32, i32) {
    %c0_i32 = arith.constant 0 : i32
    %c0_i32_0 = arith.constant 0 : i32
    return %arg0, %c0_i32, %arg2 : i32, i32, i32
  }
  func.func @transform_3(%arg0: i32, %arg1: i32, %arg2: i32) -> (i32, i32, i32) {
    %c1_i32 = arith.constant 1 : i32
    %0 = arith.muli %arg0, %c1_i32 : i32
    %1 = arith.addi %0, %arg1 : i32
    %c0_i32 = arith.constant 0 : i32
    %c0_i32_0 = arith.constant 0 : i32
    %c0_i32_1 = arith.constant 0 : i32
    return %1, %c0_i32, %c0_i32_0 : i32, i32, i32
  }
}

</mosaic_0001>

<llo_original>
// kernel: tpu_custom_call.1
$region0: #{tpu_custom_call.1}
  #allocation0 [shape = 'u32[]', space=smem, size = 0x4, offset = 0x4, fixed_abs, tag = 'smem constant byte address 0x4 - core index']
  #allocation1 [shape = 'u32[144,128]{1,0:T(1,128)}', space=vmem, size = 0x12000, scoped, tag = 'internal scratch']
  #allocation2 [shape = 'f32[1,256]{1,0:T(1,128)}', space=vmem, size = 0x400, scoped, tag = 'scratch operand']
  %s0 = inlined_call_operand.hbm [shape: f32[2,8,256], index: 0, kind: input, shape index: {}]
  %s1 = inlined_call_operand.hbm [shape: f32[2,8,256], index: 1, kind: input, shape index: {}]
  %s2 = inlined_call_operand.vmem [shape: s32[2,1,256], index: 2, kind: input, shape index: {}]
  %s3 = inlined_call_operand.hbm [shape: f32[2,1,128], index: 3, kind: output, shape index: {}]
  %s4 = sld [smem:[#allocation0]]
  $region61: #{tpu_custom_call.1} parent=0
    _
  %s6 = ssub.s32 1, %s4
  %s7 = scalar_select 0, %s6, %s4
  $region1: #{tpu_custom_call.1} parent=0
    #allocation3 [shape = 'u8[16384]{0}', space=vmem, size = 0x4000, scoped, tag = 'input window, operand 0']
    #allocation4 [shape = 's32[2]{0}', space=sflag, size = 0x8, scoped, tag = 'scoped memory for tpu_custom_call.1']
    #allocation5 [shape = 's32[2]{0}', space=sflag, size = 0x8, scoped, tag = 'scoped memory for tpu_custom_call.1']
    #allocation6 [shape = 'u8[16384]{0}', space=vmem, size = 0x4000, scoped, tag = 'input window, operand 1']
    #allocation7 [shape = 's32[2]{0}', space=sflag, size = 0x8, scoped, tag = 'scoped memory for tpu_custom_call.1']
    #allocation8 [shape = 'u8[1024]{0}', space=vmem, size = 0x400, scoped, tag = 'output window, operand 0']
    %8 = vsyncpa [#allocation4], 0
    %s9 = scalar_lea.sflag [#allocation4], 1
    %10 = vsyncpa %s9, 0
    %11 = vsyncpa [#allocation7], 0
    %s12 = scalar_lea.sflag [#allocation7], 1
    %13 = vsyncpa %s12, 0
    %14 = vsyncpa [#allocation5], 0
    %s15 = scalar_lea.sflag [#allocation5], 1
    %16 = vsyncpa %s15, 0
    loop: start=0, step=1, limit=4
    $region2: #{tpu_custom_call.1} parent=1 // loop_pre_header
      _
    $region3: #{tpu_custom_call.1} parent=1 // loop_header
      %s18 = sphi 0, %s22
      %p19 = scmp.ge.s32.totalorder %s18, 4
      %s25 = sphi 0, %s44
      %s26 = sphi 0, %s40
      %s27 = sphi 0, %s36
      %s28 = sphi 0, %s25
      %s29 = sphi 0, %s26
      %s30 = sphi 0, %s27
      %s31 = sphi 0, %s28
      %s32 = sphi 0, %s29
      %s33 = sphi 0, %s30
      %s49 = sphi 0, %s51
      %s52 = sphi 0, %s49
      %s53 = sphi 0, %s52
      %s69 = sphi 0, %s53
      %s77 = sphi 0, %s79
      %s80 = sphi 0, %s77
      %s81 = sphi 0, %s80
      %s97 = sphi 0, %s81
      %s105 = sphi 0, %s107
      %s108 = sphi 0, %s105
      %s109 = sphi 0, %s108
      %s125 = sphi 0, %s109
      %s133 = sphi 0, %s135
      %s136 = sphi 0, %s133
      %s137 = sphi 0, %s136
      %s153 = sphi 0, %s137
    $region4: #{tpu_custom_call.1} parent=1 // loop_header_branch
      %21 = sbr.rel (%p19) target = $region8
    $region5: #{tpu_custom_call.1} parent=1 // loop_body
      %s23 = ssub.s32 %s18, 1
      %s24 = ssub.s32 %s18, 2
      %s34 = sadd.s32 1, %s27
      %p35 = scmp.ge.s32.totalorder %s34, 1
      %s36 = scalar_select %p35, 0, %s34
      %s37 = sadd.s32 1, %s26
      %s38 = scalar_select %p35, %s37, %s26
      %p39 = scmp.ge.s32.totalorder %s38, 1
      %s40 = scalar_select %p39, 0, %s38
      %s41 = sadd.s32 1, %s25
      %s42 = scalar_select %p39, %s41, %s25
      %p43 = scmp.ge.s32.totalorder %s42, 2
      %s44 = scalar_select %p43, 0, %s42
      %s45 = ssub.s32 %s25, %s44
      %s46 = ssub.s32 %s27, %s36
      %s47 = sor.u32 %s45, %s46
      %p48 = scmp.eq.s32.totalorder %s47, 0
      %s50 = sadd.s32 %s49, 1
      %s51 = scalar_select %p48, %s49, %s50
      %p54 = pneg %p48
      %p55 = scmp.eq.s32.totalorder %s18, 1
      %p56 = por %p54, %p55
      %p57 = scmp.ne.s32.totalorder %s49, %s52
      %p58 = scmp.eq.s32.totalorder %s18, 0
      %p59 = por %p57, %p58
      %p60 = scmp.ne.s32.totalorder %s49, %s52
      %p61 = scmp.eq.s32.totalorder %s23, 1
      %p62 = por %p60, %p61
      %p63 = scmp.ne.s32.totalorder %s52, %s53
      %p64 = scmp.eq.s32.totalorder %s23, 0
      %p65 = por %p63, %p64
      %p66 = scmp.ne.s32.totalorder %s52, %s53
      %p67 = scmp.eq.s32.totalorder %s24, 1
      %p68 = por %p66, %p67
      %p70 = scmp.ne.s32.totalorder %s53, %s69
      %p71 = scmp.eq.s32.totalorder %s24, 0
      %p72 = por %p70, %p71
      %s73 = ssub.s32 %s25, %s44
      %s74 = ssub.s32 %s27, %s36
      %s75 = sor.u32 %s73, %s74
      %p76 = scmp.eq.s32.totalorder %s75, 0
      %s78 = sadd.s32 %s77, 1
      %s79 = scalar_select %p76, %s77, %s78
      %p82 = pneg %p76
      %p83 = scmp.eq.s32.totalorder %s18, 1
      %p84 = por %p82, %p83
      %p85 = scmp.ne.s32.totalorder %s77, %s80
      %p86 = scmp.eq.s32.totalorder %s18, 0
      %p87 = por %p85, %p86
      %p88 = scmp.ne.s32.totalorder %s77, %s80
      %p89 = scmp.eq.s32.totalorder %s23, 1
      %p90 = por %p88, %p89
      %p91 = scmp.ne.s32.totalorder %s80, %s81
      %p92 = scmp.eq.s32.totalorder %s23, 0
      %p93 = por %p91, %p92
      %p94 = scmp.ne.s32.totalorder %s80, %s81
      %p95 = scmp.eq.s32.totalorder %s24, 1
      %p96 = por %p94, %p95
      %p98 = scmp.ne.s32.totalorder %s81, %s97
      %p99 = scmp.eq.s32.totalorder %s24, 0
      %p100 = por %p98, %p99
      %s101 = ssub.s32 %s25, %s44
      %s102 = ssub.s32 %s27, %s36
      %s103 = sor.u32 %s101, %s102
      %p104 = scmp.eq.s32.totalorder %s103, 0
      %s106 = sadd.s32 %s105, 1
      %s107 = scalar_select %p104, %s105, %s106
      %p110 = pneg %p104
      %p111 = scmp.eq.s32.totalorder %s18, 1
      %p112 = por %p110, %p111
      %p113 = scmp.ne.s32.totalorder %s105, %s108
      %p114 = scmp.eq.s32.totalorder %s18, 0
      %p115 = por %p113, %p114
      %p116 = scmp.ne.s32.totalorder %s105, %s108
      %p117 = scmp.eq.s32.totalorder %s23, 1
      %p118 = por %p116, %p117
      %p119 = scmp.ne.s32.totalorder %s108, %s109
      %p120 = scmp.eq.s32.totalorder %s23, 0
      %p121 = por %p119, %p120
      %p122 = scmp.ne.s32.totalorder %s108, %s109
      %p123 = scmp.eq.s32.totalorder %s24, 1
      %p124 = por %p122, %p123
      %p126 = scmp.ne.s32.totalorder %s109, %s125
      %p127 = scmp.eq.s32.totalorder %s24, 0
      %p128 = por %p126, %p127
      %s129 = sadd.s32 %s25, %s26
      %s130 = sadd.s32 %s44, %s40
      %s131 = ssub.s32 %s129, %s130
      %p132 = scmp.eq.s32.totalorder %s131, 0
      %s134 = sadd.s32 %s133, 1
      %s135 = scalar_select %p132, %s133, %s134
      %p138 = pneg %p132
      %p139 = scmp.eq.s32.totalorder %s18, 1
      %p140 = por %p138, %p139
      %p141 = scmp.ne.s32.totalorder %s133, %s136
      %p142 = scmp.eq.s32.totalorder %s18, 0
      %p143 = por %p141, %p142
      %p144 = scmp.ne.s32.totalorder %s133, %s136
      %p145 = scmp.eq.s32.totalorder %s23, 1
      %p146 = por %p144, %p145
      %p147 = scmp.ne.s32.totalorder %s136, %s137
      %p148 = scmp.eq.s32.totalorder %s23, 0
      %p149 = por %p147, %p148
      %p150 = scmp.ne.s32.totalorder %s136, %s137
      %p151 = scmp.eq.s32.totalorder %s24, 1
      %p152 = por %p150, %p151
      %p154 = scmp.ne.s32.totalorder %s137, %s153
      %p155 = scmp.eq.s32.totalorder %s24, 0
      %p156 = por %p154, %p155
      %p157 = scmp.le.s32.totalorder 1, %s18
      %p158 = scmp.lt.s32.totalorder %s18, 3
      %p159 = pnand %p157, %p158
      %p160 = pneg %p159
      // Predicated region
      $region9: #{tpu_custom_call.1} parent=5 // pred_check
        _
      $region10: #{tpu_custom_call.1} parent=5 // pred_check_branch
        %162 = sbr.rel (%p159) target = $region12
      $region11: #{tpu_custom_call.1} parent=5 // pred_region
        %s163 = ssub.s32 %s18, 1
      $region12: #{tpu_custom_call.1} parent=5 // pred_fallthru
        _
      %p164 = scmp.lt.s32.totalorder %s18, 2
      // Predicated region
      $region13: #{tpu_custom_call.1} parent=5 // pred_check
        %p165 = pneg %p164
      $region14: #{tpu_custom_call.1} parent=5 // pred_check_branch
        %167 = sbr.rel (%p165) target = $region16
      $region15: #{tpu_custom_call.1} parent=5 // pred_region
        // Predicated region
        $region17: #{tpu_custom_call.1} parent=15 // pred_check
          %p168 = pneg %p59
        $region18: #{tpu_custom_call.1} parent=15 // pred_check_branch
          %170 = sbr.rel (%p168) target = $region20
        $region19: #{tpu_custom_call.1} parent=15 // pred_region
          %s171 = sand.u32 %s49, 1
          %s172 = scalar_lea.sflag [#allocation4], %s171
          %s173 = sand.u32 %s49, 1
          %s174 = smul.addr %s173, 16
          %s175 = scalar_lea.vmem [#allocation3], %s174
          %s176 = smul.u32 2, %s27
          %s178 = ssub.s32 256, 256
          %179 = vsyncadd %s172, %s178
          %s180 = smul.addr %s25, 2
          %s181 = sadd.s32 %s176, %s180
          %s182 = smul.addr %s181, 128
          %s183 = scalar_lea.hbm %s0, %s182
          %s185 = sshll.u32 %s175, 4
          %s186 = int_to_ptr.vmem [resolvable:$true] %s185
          %188 = dma.hbm_to_vmem [thread:$0]  %s183, 256, %s186, %s172
        $region20: #{tpu_custom_call.1} parent=15 // pred_fallthru
          _
        // Predicated region
        $region21: #{tpu_custom_call.1} parent=15 // pred_check
          %p189 = pneg %p87
        $region22: #{tpu_custom_call.1} parent=15 // pred_check_branch
          %191 = sbr.rel (%p189) target = $region24
        $region23: #{tpu_custom_call.1} parent=15 // pred_region
          %s192 = sand.u32 %s77, 1
          %s193 = scalar_lea.sflag [#allocation7], %s192
          %s194 = sand.u32 %s77, 1
          %s195 = smul.addr %s194, 16
          %s196 = scalar_lea.vmem [#allocation6], %s195
          %s197 = smul.u32 2, %s27
          %s199 = ssub.s32 256, 256
          %200 = vsyncadd %s193, %s199
          %s201 = smul.addr %s25, 2
          %s202 = sadd.s32 %s197, %s201
          %s203 = smul.addr %s202, 128
          %s204 = scalar_lea.hbm %s1, %s203
          %s206 = sshll.u32 %s196, 4
          %s207 = int_to_ptr.vmem [resolvable:$true] %s206
          %209 = dma.hbm_to_vmem [thread:$0]  %s204, 256, %s207, %s193
        $region24: #{tpu_custom_call.1} parent=15 // pred_fallthru
          _
        // Predicated region
        $region25: #{tpu_custom_call.1} parent=15 // pred_check
          %p210 = pneg %p115
        $region26: #{tpu_custom_call.1} parent=15 // pred_check_branch
          %212 = sbr.rel (%p210) target = $region28
        $region27: #{tpu_custom_call.1} parent=15 // pred_region
          %s213 = smul.u32 2, %s27
          %p214 = scmp.lt.s32.totalorder %s25, 1
          %s215 = scalar_select %p214, %s25, 1
          %p216 = scmp.lt.s32.totalorder %s213, 1
          %s217 = scalar_select %p216, %s213, 1
          %s218 = smul.addr %s215, 2
          %s219 = sadd.s32 %s217, %s218
          %s220 = scalar_lea.vmem %s2, %s219
          %s221 = smul.u32 2, %s27
        $region28: #{tpu_custom_call.1} parent=15 // pred_fallthru
          _
      $region16: #{tpu_custom_call.1} parent=5 // pred_fallthru
        _
      %p222 = scmp.le.s32.totalorder 1, %s18
      %p223 = scmp.lt.s32.totalorder %s18, 3
      %p224 = pnand %p222, %p223
      %p225 = pneg %p224
      // Predicated region
      $region29: #{tpu_custom_call.1} parent=5 // pred_check
        _
      $region30: #{tpu_custom_call.1} parent=5 // pred_check_branch
        %227 = sbr.rel (%p224) target = $region32
      $region31: #{tpu_custom_call.1} parent=5 // pred_region
        %s228 = ssub.s32 %s18, 1
        %s229 = sand.u32 %s52, 1
        %s230 = scalar_lea.sflag [#allocation4], %s229
        %s231 = sand.u32 %s52, 1
        %s232 = smul.addr %s231, 16
        %s233 = scalar_lea.vmem [#allocation3], %s232
        // Predicated region
        $region33: #{tpu_custom_call.1} parent=31 // pred_check
          %p234 = pneg %p65
        $region34: #{tpu_custom_call.1} parent=31 // pred_check_branch
          %236 = sbr.rel (%p234) target = $region36
        $region35: #{tpu_custom_call.1} parent=31 // pred_region
          %237 = dma.done %s230, 256
        $region36: #{tpu_custom_call.1} parent=31 // pred_fallthru
          _
        %s238 = sand.u32 %s80, 1
        %s239 = scalar_lea.sflag [#allocation7], %s238
        %s240 = sand.u32 %s80, 1
        %s241 = smul.addr %s240, 16
        %s242 = scalar_lea.vmem [#allocation6], %s241
        // Predicated region
        $region37: #{tpu_custom_call.1} parent=31 // pred_check
          %p243 = pneg %p93
        $region38: #{tpu_custom_call.1} parent=31 // pred_check_branch
          %245 = sbr.rel (%p243) target = $region40
        $region39: #{tpu_custom_call.1} parent=31 // pred_region
          %246 = dma.done %s239, 256
        $region40: #{tpu_custom_call.1} parent=31 // pred_fallthru
          _
        %s247 = sand.u32 %s52, 1
        %s248 = scalar_lea.sflag [#allocation4], %s247
        %s249 = sand.u32 %s52, 1
        %s250 = smul.addr %s249, 16
        %s251 = scalar_lea.vmem [#allocation3], %s250
        %p252 = pneg %p65
        %p253 = pneg %p62
        %s254 = sand.u32 %s80, 1
        %s255 = scalar_lea.sflag [#allocation7], %s254
        %s256 = sand.u32 %s80, 1
        %s257 = smul.addr %s256, 16
        %s258 = scalar_lea.vmem [#allocation6], %s257
        %p259 = pneg %p93
        %p260 = pneg %p90
        %s261 = smul.u32 2, %s30
        %p262 = scmp.lt.s32.totalorder %s28, 1
        %s263 = scalar_select %p262, %s28, 1
        %p264 = scmp.lt.s32.totalorder %s261, 1
        %s265 = scalar_select %p264, %s261, 1
        %s266 = smul.addr %s263, 2
        %s267 = sadd.s32 %s265, %s266
        %s268 = scalar_lea.vmem %s2, %s267
        %p269 = pneg %p121
        %p270 = pneg %p118
        %p271 = pneg %p149
        %p272 = pneg %p146
        %s273 = sand.u32 %s136, 1
        %s274 = scalar_lea.sflag [#allocation5], %s273
        %s275 = sand.u32 %s136, 1
        %s276 = scalar_lea.vmem [#allocation8], %s275
        %s277 = smul.u32 2, %s30
        %s278 = smul.u32 2, %s30
        %s279 = smul.u32 2, %s30
        %p280 = scmp.lt.s32.totalorder %s28, 1
        %s281 = scalar_select %p280, %s28, 1
        %p282 = scmp.lt.s32.totalorder %s279, 1
        %s283 = scalar_select %p282, %s279, 1
        %s284 = smul.addr %s281, 2
        %s285 = sadd.s32 %s283, %s284
        %s286 = scalar_lea.vmem %s2, %s285
        %s287 = smul.u32 2, %s30
        %s288 = sadd.s32 %s28, %s29
        %p289 = scmp.eq.s32.totalorder %s30, 0
        // Predicated region
        $region41: #{tpu_custom_call.1} parent=31 // pred_check
          %p290 = pneg %p289
        $region42: #{tpu_custom_call.1} parent=31 // pred_check_branch
          %292 = sbr.rel (%p290) target = $region44
        $region43: #{tpu_custom_call.1} parent=31 // pred_region
          %v293 = vlaneseq
          %vm294 = vcmp.ge.s32.totalorder %v293, 0
          %vm295 = vcmp.lt.s32.totalorder %v293, 256
          %vm296 = vmand %vm294, %vm295
          %297 = vst.msk [vmem:[#allocation2] sm:$0x3] %vm296, 0.0
        $region44: #{tpu_custom_call.1} parent=31 // pred_fallthru
          _
        %v298 = vld [vmem:[%s286] sm:$0x3]
        %v299 = vlaneseq
        %v300 = vshrl.u32 %v299, 7
        %v301 = vlaneseq
        %v302 = vshrl.u32 %v301, 7
        %v303 = vsub.s32 0, %v302
        %v304 = vrot.slane %v298, %v303
        %v305 = vlaneseq
        %v306 = vshrl.u32 %v305, 7
        %v307 = vsub.s32 1, %v306
        %v308 = vrot.slane %v298, %v307
        %vm309 = vcmp.eq.s32.totalorder %v300, %v304
        %vm310 = vcmp.eq.s32.totalorder %v300, %v308
        %v311 = vld [vmem:[%s233] sm:$0xff]
        %v312 = vld [vmem:[%s233 + $0x8] sm:$0xff]
        %v313 = vrot.slane %v311, 4
        %v314 = vmax.f32 %v311, %v313
        %v315 = vrot.slane %v314, 2
        %v316 = vmax.f32 %v314, %v315
        %v317 = vrot.slane %v316, 1
        %v318 = vmax.f32 %v316, %v317
        %v319 = vrot.slane %v312, 4
        %v320 = vmax.f32 %v312, %v319
        %v321 = vrot.slane %v320, 2
        %v322 = vmax.f32 %v320, %v321
        %v323 = vrot.slane %v322, 1
        %v324 = vmax.f32 %v322, %v323
        %v325 = vsel %vm309, %v311, 0.0
        %v326 = vsel %vm310, %v312, 0.0
        %v327 = vsub.f32 %v311, %v318
        %v328 = vsub.f32 %v312, %v324
        %v329 = vmul.f32 %v327, 1.442695
        %v330 = vpow.pop %v329
        %v331 = vmul.f32 %v328, 1.442695
        %v332 = vpow.pop %v331
        %v333 = vrot.slane %v325, 4
        %v334 = vadd.f32 %v325, %v333
        %v335 = vrot.slane %v334, 2
        %v336 = vadd.f32 %v334, %v335
        %v337 = vrot.slane %v336, 1
        %v338 = vadd.f32 %v336, %v337
        %v339 = vrot.slane %v326, 4
        %v340 = vadd.f32 %v326, %v339
        %v341 = vrot.slane %v340, 2
        %v342 = vadd.f32 %v340, %v341
        %v343 = vrot.slane %v342, 1
        %v344 = vadd.f32 %v342, %v343
        %v345 = vrot.slane %v330, 4
        %v346 = vadd.f32 %v330, %v345
        %v347 = vrot.slane %v346, 2
        %v348 = vadd.f32 %v346, %v347
        %v349 = vrot.slane %v348, 1
        %v350 = vadd.f32 %v348, %v349
        %v351 = vrot.slane %v332, 4
        %v352 = vadd.f32 %v332, %v351
        %v353 = vrot.slane %v352, 2
        %v354 = vadd.f32 %v352, %v353
        %v355 = vrot.slane %v354, 1
        %v356 = vadd.f32 %v354, %v355
        %v357 = vlog2.pop %v350
        %v358 = vmul.f32 %v357, 0.6931472
        %v359 = vlog2.pop %v356
        %v360 = vmul.f32 %v359, 0.6931472
        %v361 = vadd.f32 %v318, %v358
        %v362 = vadd.f32 %v324, %v360
        %v363 = vsub.f32 %v361, %v338
        %v364 = vsub.f32 %v362, %v344
        %v365 = vld [vmem:[%s242] sm:$0xff]
        %v366 = vld [vmem:[%s242 + $0x8] sm:$0xff]
        %v367 = vrot.slane %v365, 4
        %v368 = vmax.f32 %v365, %v367
        %v369 = vrot.slane %v368, 2
        %v370 = vmax.f32 %v368, %v369
        %v371 = vrot.slane %v370, 1
        %v372 = vmax.f32 %v370, %v371
        %v373 = vrot.slane %v366, 4
        %v374 = vmax.f32 %v366, %v373
        %v375 = vrot.slane %v374, 2
        %v376 = vmax.f32 %v374, %v375
        %v377 = vrot.slane %v376, 1
        %v378 = vmax.f32 %v376, %v377
        %v379 = vsel %vm309, %v365, 0.0
        %v380 = vsel %vm310, %v366, 0.0
        %v381 = vsub.f32 %v365, %v372
        %v382 = vsub.f32 %v366, %v378
        %v383 = vmul.f32 %v381, 1.442695
        %v384 = vpow.pop %v383
        %v385 = vmul.f32 %v382, 1.442695
        %v386 = vpow.pop %v385
        %v387 = vrot.slane %v379, 4
        %v388 = vadd.f32 %v379, %v387
        %v389 = vrot.slane %v388, 2
        %v390 = vadd.f32 %v388, %v389
        %v391 = vrot.slane %v390, 1
        %v392 = vadd.f32 %v390, %v391
        %v393 = vrot.slane %v380, 4
        %v394 = vadd.f32 %v380, %v393
        %v395 = vrot.slane %v394, 2
        %v396 = vadd.f32 %v394, %v395
        %v397 = vrot.slane %v396, 1
        %v398 = vadd.f32 %v396, %v397
        %v399 = vrot.slane %v384, 4
        %v400 = vadd.f32 %v384, %v399
        %v401 = vrot.slane %v400, 2
        %v402 = vadd.f32 %v400, %v401
        %v403 = vrot.slane %v402, 1
        %v404 = vadd.f32 %v402, %v403
        %v405 = vrot.slane %v386, 4
        %v406 = vadd.f32 %v386, %v405
        %v407 = vrot.slane %v406, 2
        %v408 = vadd.f32 %v406, %v407
        %v409 = vrot.slane %v408, 1
        %v410 = vadd.f32 %v408, %v409
        %v411 = vlog2.pop %v404
        %v412 = vmul.f32 %v411, 0.6931472
        %v413 = vlog2.pop %v410
        %v414 = vmul.f32 %v413, 0.6931472
        %v415 = vadd.f32 %v372, %v412
        %v416 = vadd.f32 %v378, %v414
        %v417 = vsub.f32 %v415, %v392
        %v418 = vsub.f32 %v416, %v398
        %v419 = vmul.f32 %v417, 0.4
        %v420 = vmul.f32 %v418, 0.4
        %v421 = vadd.f32 %v363, %v419
        %v422 = vadd.f32 %v364, %v420
        %v423 = vld [vmem:[#allocation2] sm:$0x3]
        %v426 = vcombine.low %v421, %v422
        %v428 = vunpack.c.l.s4 1966171168
        %v429 = vunpack.c.0.s8 %v428
        %v430 = vlaneseq
        %v431 = vshrl.u32 %v430, 7
        %v432 = vsub.s32 %v429, %v431
        %v433 = vrot.slane %v426, %v432
        %v435 = vunpack.c.l.s4 1966171168
        %v436 = vunpack.c.0.s8 %v435
        %v437 = vlaneseq
        %v438 = vshrl.u32 %v437, 7
        %v439 = vsub.s32 %v436, %v438
        %v440 = vrot.slane %v433, %v439
        %v442 = vadd.f32 %v423, %v440
        %v443 = vlaneseq
        %vm444 = vcmp.ge.s32.totalorder %v443, 0
        %vm445 = vcmp.lt.s32.totalorder %v443, 256
        %vm446 = vmand %vm444, %vm445
        %447 = vst.msk [vmem:[#allocation2] sm:$0x3] %vm446, %v442
        // Predicated region
        $region45: #{tpu_custom_call.1} parent=31 // pred_check
          %p448 = pneg %p289
        $region46: #{tpu_custom_call.1} parent=31 // pred_check_branch
          %450 = sbr.rel (%p448) target = $region48
        $region47: #{tpu_custom_call.1} parent=31 // pred_region
          %v451 = vld [vmem:[#allocation2] sm:$0x3]
          %v453 = vlaneseq
          %v454 = vshrl.u32 %v453, 7
          %v455 = vsub.s32 0, %v454
          %v456 = vrot.slane %v451, %v455
          %v457 = vlaneseq
          %v458 = vshrl.u32 %v457, 7
          %v459 = vsub.s32 1, %v458
          %v460 = vrot.slane %v451, %v459
          %vm463 = vcmask 1040384
          %v464 = vsel %vm463, %v456, 0.0
          %v465 = vsel %vm463, %v460, 0.0
          %v466 = vadd.f32 %v464, %v465
          %467 = vadd.xlane.f32.xlu0 %v466
          %v468 = vpop.xlane.xlu0 %467
          %v469 = vrot.slane %v468, 4
          %v470 = vadd.f32 %v468, %v469
          %v471 = vrot.slane %v470, 2
          %v472 = vadd.f32 %v470, %v471
          %v473 = vrot.slane %v472, 1
          %v474 = vadd.f32 %v472, %v473
          %s475 = vtos %v474
          %s476 = smul.f32 %s475, 0.001953125
          %v477 = vlaneseq
          %v478 = vand.u32 %v477, 127
          %vm479 = vcmp.eq.s32.totalorder %v478, 0
          %v480 = vstv %s476
          %v481 = vsel %vm479, %v480, 0.0
          %482 = vst [vmem:[%s276] sm:$0x1] %v481
        $region48: #{tpu_custom_call.1} parent=31 // pred_fallthru
          _
        %s483 = sand.u32 %s136, 1
        %s484 = scalar_lea.sflag [#allocation5], %s483
        %s485 = sand.u32 %s136, 1
        %s486 = scalar_lea.vmem [#allocation8], %s485
        // Predicated region
        $region49: #{tpu_custom_call.1} parent=31 // pred_check
          %p487 = pneg %p146
        $region50: #{tpu_custom_call.1} parent=31 // pred_check_branch
          %489 = sbr.rel (%p487) target = $region52
        $region51: #{tpu_custom_call.1} parent=31 // pred_region
          %s490 = sadd.s32 %s28, %s29
          %s492 = ssub.s32 16, 16
          %493 = vsyncadd %s484, %s492
          %s494 = smul.addr %s490, 16
          %s495 = scalar_lea.hbm %s3, %s494
          %s497 = sshll.u32 %s486, 4
          %s498 = int_to_ptr.vmem [resolvable:$true] %s497
          %500 = dma.vmem_to_hbm [thread:$0]  %s498, 16, %s495, %s484
        $region52: #{tpu_custom_call.1} parent=31 // pred_fallthru
          _
      $region32: #{tpu_custom_call.1} parent=5 // pred_fallthru
        _
      %p501 = scmp.le.s32.totalorder 2, %s18
      // Predicated region
      $region53: #{tpu_custom_call.1} parent=5 // pred_check
        %p502 = pneg %p501
      $region54: #{tpu_custom_call.1} parent=5 // pred_check_branch
        %504 = sbr.rel (%p502) target = $region56
      $region55: #{tpu_custom_call.1} parent=5 // pred_region
        %s505 = ssub.s32 %s18, 2
        // Predicated region
        $region57: #{tpu_custom_call.1} parent=55 // pred_check
          %p506 = pneg %p152
        $region58: #{tpu_custom_call.1} parent=55 // pred_check_branch
          %508 = sbr.rel (%p506) target = $region60
        $region59: #{tpu_custom_call.1} parent=55 // pred_region
          %s509 = sand.u32 %s137, 1
          %s510 = scalar_lea.sflag [#allocation5], %s509
          %s511 = sand.u32 %s137, 1
          %s512 = scalar_lea.vmem [#allocation8], %s511
          %513 = dma.done %s510, 16
        $region60: #{tpu_custom_call.1} parent=55 // pred_fallthru
          _
      $region56: #{tpu_custom_call.1} parent=5 // pred_fallthru
        _
    $region6: #{tpu_custom_call.1} parent=1 // loop_footer
      %s22 = sadd.s32 1, %s18
    $region7: #{tpu_custom_call.1} parent=1 // loop_footer_branch
      %17 = sbr.rel target = $region3
    $region8: #{tpu_custom_call.1} parent=1 // loop_exit
      _
    %514 = vsyncpa [#allocation4], 1
    %s515 = scalar_lea.sflag [#allocation4], 1
    %516 = vsyncpa %s515, 1
    %517 = vsyncpa [#allocation7], 1
    %s518 = scalar_lea.sflag [#allocation7], 1
    %519 = vsyncpa %s518, 1
    %520 = vsyncpa [#allocation5], 1
    %s521 = scalar_lea.sflag [#allocation5], 1
    %522 = vsyncpa %s521, 1

</llo_original>
